<compile_context>
chip_gen: v6e
topology: v6e:2x2x1
jax: 0.10.0
libtpu: 0.0.40
codegen_flags: <defaults>
</compile_context>

<pallas_src>
import functools

import jax
import jax.numpy as jnp
from jax.experimental import pallas as pl
from jax.experimental.pallas import tpu as pltpu

LANE = 128
SUBLANE = 8


def _round_up(x, m):
    return ((x + m - 1) // m) * m


def _mlp_kernel(x_ref, w1_ref, b1_ref, w2_ref, b2_ref,
                w3_ref, b3_ref, w4_ref, b4_ref, out_ref):
    """One batch tile of the 4-layer MLP.  All hidden widths 128-padded."""
    # Layer 1: (TILE_B, F) @ (F, 128) -> f32 accum, bias + ReLU in f32.
    h = jnp.dot(x_ref[...], w1_ref[...], preferred_element_type=jnp.float32)
    h = jnp.maximum(h + b1_ref[...], 0.0)
    # Layer 2: (TILE_B, 128) @ (128, 128)
    h = jnp.dot(h.astype(w2_ref.dtype), w2_ref[...],
                preferred_element_type=jnp.float32)
    h = jnp.maximum(h + b2_ref[...], 0.0)
    # Layer 3: (TILE_B, 128) @ (128, 128)
    h = jnp.dot(h.astype(w3_ref.dtype), w3_ref[...],
                preferred_element_type=jnp.float32)
    h = jnp.maximum(h + b3_ref[...], 0.0)
    # Layer 4 (logits): (TILE_B, 128) @ (128, 128); real logit is column 0.
    h = jnp.dot(h.astype(w4_ref.dtype), w4_ref[...],
                preferred_element_type=jnp.float32)
    logit = h[:, 0:1] + b4_ref[...][:, 0:1]
    out_ref[...] = logit.astype(out_ref.dtype)


def _prepare_params(params, input_size, compute_dtype):
    """Zero-pad every layer to lane-dense (multiple-of-128) widths."""
    prepared = []
    prev_pad = input_size                      # x keeps its native feature dim
    for i in range(1, 5):
        w = params[f"w{i}"]
        b = params[f"b{i}"].reshape(1, -1)
        fan_in, fan_out = w.shape
        out_pad = _round_up(fan_out, LANE)
        wp = jnp.zeros((prev_pad, out_pad), compute_dtype)
        wp = wp.at[:fan_in, :fan_out].set(w.astype(compute_dtype))
        bp = jnp.zeros((1, out_pad), jnp.float32)
        bp = bp.at[:, :fan_out].set(b.astype(jnp.float32))
        prepared += [wp, bp]
        prev_pad = out_pad
    return prepared


@functools.partial(jax.jit, static_argnames=("tile_b", "compute_dtype"))
def modelw1_forward(x, params, *, tile_b=1024, compute_dtype=jnp.float32):
    """x: (B, input_size) f32; params: dict w1..w4/b1..b4. Returns (B, 1) f32 logits."""
    B, F = x.shape

    # Batch tiling: tile must be a multiple of 8 (sublanes); pad B up to a
    # multiple of the tile so the grid covers it exactly.
    tile_b = min(tile_b, _round_up(B, SUBLANE))
    tile_b = _round_up(tile_b, SUBLANE)
    B_pad = _round_up(B, tile_b)
    if B_pad != B:
        x = jnp.pad(x, ((0, B_pad - B), (0, 0)))
    x = x.astype(compute_dtype)

    prepared = _prepare_params(params, F, compute_dtype)
    w1, b1, w2, b2, w3, b3, w4, b4 = prepared

    grid = (pl.cdiv(B_pad, tile_b),)

    # Weights/biases: full-array blocks with constant index maps (VMEM-resident).
    def const_spec(a):
        return pl.BlockSpec(a.shape, lambda i: (0, 0))

    itemsize = jnp.dtype(compute_dtype).itemsize
    weight_bytes = sum(int(p.size) * p.dtype.itemsize for p in prepared)

    # Cost estimate (logical problem; advisory only).
    flops = 2 * B_pad * (F * 64 + 64 * 16 + 16 * 4 + 4 * 1)
    bytes_accessed = B_pad * F * itemsize + B_pad * 4 + weight_bytes

    # VMEM budget: double-buffered x/out tiles + resident weights +
    # intermediates, with headroom; clamped to stay safe on v7x's 64 MiB.
    est = (2 * tile_b * F * itemsize          # x double buffer
           + 2 * tile_b * LANE * 4            # out tiles (lane-padded in VMEM)
           + weight_bytes
           + 6 * tile_b * LANE * 4)           # intermediates / spill headroom
    vmem_limit = int(min(max(2 * est, 16 * 1024 * 1024), 48 * 1024 * 1024))

    out = pl.pallas_call(
        _mlp_kernel,
        out_shape=jax.ShapeDtypeStruct((B_pad, 1), jnp.float32),
        grid=grid,
        in_specs=[
            pl.BlockSpec((tile_b, F), lambda i: (i, 0)),   # x: batch-tiled
            const_spec(w1), const_spec(b1),
            const_spec(w2), const_spec(b2),
            const_spec(w3), const_spec(b3),
            const_spec(w4), const_spec(b4),
        ],
        out_specs=pl.BlockSpec((tile_b, 1), lambda i: (i, 0)),
        compiler_params=pltpu.CompilerParams(
            dimension_semantics=("parallel",),
            vmem_limit_bytes=vmem_limit,
        ),
        cost_estimate=pl.CostEstimate(
            flops=flops, transcendentals=0, bytes_accessed=bytes_accessed),
    )(x, w1, b1, w2, b2, w3, b3, w4, b4)

    # Drop batch padding; output is already (B_pad, 1).
    return out[:B]


def init_params(key, input_size, hidden_sizes=(64, 16, 4), output_size=1):
    """Deterministic synthetic init (uniform, PyTorch-Linear-style scale)."""
    sizes = [input_size, *hidden_sizes, output_size]
    params = {}
    for i in range(4):
        fan_in, fan_out = sizes[i], sizes[i + 1]
        key, kw, kb = jax.random.split(key, 3)
        bound = 1.0 / jnp.sqrt(fan_in)
        params[f"w{i+1}"] = jax.random.uniform(
            kw, (fan_in, fan_out), jnp.float32, -bound, bound)
        params[f"b{i+1}"] = jax.random.uniform(
            kb, (1, fan_out), jnp.float32, -bound, bound)
    return params


def reference_forward(x, params):
    h = x
    for i in range(1, 4):
        h = jnp.maximum(h @ params[f"w{i}"] + params[f"b{i}"], 0.0)
    return h @ params["w4"] + params["b4"]


if __name__ == "__main__":
    key = jax.random.PRNGKey(0)
    B, input_size = 8, 32

    key, kx = jax.random.split(key)
    x = jax.random.normal(kx, (B, input_size), jnp.float32)
    params = init_params(key, input_size)

    # f32 path (tight check).
    logits = modelw1_forward(x, params)
    jax.block_until_ready(logits)
    ref = reference_forward(x, params)
    assert logits.shape == (B, 1)
    assert jnp.allclose(logits, ref, atol=1e-5, rtol=1e-5)

    # Multi-tile path with a ragged batch (exercises batch padding + grid).
    key, kx2 = jax.random.split(key)
    B2 = 200
    x2 = jax.random.normal(kx2, (B2, input_size), jnp.float32)
    logits2 = modelw1_forward(x2, params, tile_b=128)
    jax.block_until_ready(logits2)
    ref2 = reference_forward(x2, params)
    assert logits2.shape == (B2, 1)
    assert jnp.allclose(logits2, ref2, atol=1e-5, rtol=1e-5)

    # bf16 compute path (halves HBM read traffic; looser tolerance expected).
    logits_bf16 = modelw1_forward(x2, params, tile_b=128,
                                  compute_dtype=jnp.bfloat16)
    jax.block_until_ready(logits_bf16)
    assert jnp.allclose(logits_bf16, ref2, atol=5e-2, rtol=5e-2)

    print("KERNEL_OK")
</pallas_src>

<mosaic_0001>
module attributes {stable_mosaic.version = 11 : i64} {
  func.func @_mlp_kernel(%arg0: i32, %arg1: memref<8x32xf32, #tpu.memory_space<vmem>>, %arg2: memref<32x128xf32, #tpu.memory_space<vmem>>, %arg3: memref<1x128xf32, #tpu.memory_space<vmem>>, %arg4: memref<128x128xf32, #tpu.memory_space<vmem>>, %arg5: memref<1x128xf32, #tpu.memory_space<vmem>>, %arg6: memref<128x128xf32, #tpu.memory_space<vmem>>, %arg7: memref<1x128xf32, #tpu.memory_space<vmem>>, %arg8: memref<128x128xf32, #tpu.memory_space<vmem>>, %arg9: memref<1x128xf32, #tpu.memory_space<vmem>>, %arg10: memref<8x1xf32, #tpu.memory_space<vmem>>) attributes {dimension_semantics = [#tpu.dimension_semantics<parallel>], iteration_bounds = array<i64: 1>, scalar_prefetch = 0 : i64, scratch_operands = 0 : i64, tpu.core_type = #tpu.core_type<tc>, window_params = [{transform_indices = @transform_0, window_bounds = array<i64: 8, 32>}, {pipeline_mode = #tpu.pipeline_mode<synchronous>, transform_indices = @transform_1, window_bounds = array<i64: 32, 128>}, {pipeline_mode = #tpu.pipeline_mode<synchronous>, transform_indices = @transform_2, window_bounds = array<i64: 1, 128>}, {pipeline_mode = #tpu.pipeline_mode<synchronous>, transform_indices = @transform_3, window_bounds = array<i64: 128, 128>}, {pipeline_mode = #tpu.pipeline_mode<synchronous>, transform_indices = @transform_4, window_bounds = array<i64: 1, 128>}, {pipeline_mode = #tpu.pipeline_mode<synchronous>, transform_indices = @transform_5, window_bounds = array<i64: 128, 128>}, {pipeline_mode = #tpu.pipeline_mode<synchronous>, transform_indices = @transform_6, window_bounds = array<i64: 1, 128>}, {pipeline_mode = #tpu.pipeline_mode<synchronous>, transform_indices = @transform_7, window_bounds = array<i64: 128, 128>}, {pipeline_mode = #tpu.pipeline_mode<synchronous>, transform_indices = @transform_8, window_bounds = array<i64: 1, 128>}, {transform_indices = @transform_9, window_bounds = array<i64: 8, 1>}]} {
    %c0 = arith.constant 0 : index
    %c0_0 = arith.constant 0 : index
    %0 = vector.load %arg1[%c0, %c0_0] : memref<8x32xf32, #tpu.memory_space<vmem>>, vector<8x32xf32>
    %c0_1 = arith.constant 0 : index
    %c0_2 = arith.constant 0 : index
    %1 = vector.load %arg2[%c0_1, %c0_2] : memref<32x128xf32, #tpu.memory_space<vmem>>, vector<32x128xf32>
    %cst = arith.constant dense<0.000000e+00> : vector<8x128xf32>
    %2 = tpu.matmul %0, %1, %cst {dimension_numbers = #tpu.dot_dimension_numbers<[1], [0], [0], [1], [0, 0, 1, 1], [], []>} : vector<8x32xf32>, vector<32x128xf32>, vector<8x128xf32> -> vector<8x128xf32>
    %c0_3 = arith.constant 0 : index
    %c0_4 = arith.constant 0 : index
    %3 = vector.load %arg3[%c0_3, %c0_4] : memref<1x128xf32, #tpu.memory_space<vmem>>, vector<1x128xf32>
    %4 = vector.broadcast %3 : vector<1x128xf32> to vector<8x128xf32>
    %5 = arith.addf %2, %4 : vector<8x128xf32>
    %cst_5 = arith.constant 0.000000e+00 : f32
    %6 = vector.broadcast %cst_5 : f32 to vector<8x128xf32>
    %7 = arith.maximumf %5, %6 : vector<8x128xf32>
    %c0_6 = arith.constant 0 : index
    %c0_7 = arith.constant 0 : index
    %8 = vector.load %arg4[%c0_6, %c0_7] : memref<128x128xf32, #tpu.memory_space<vmem>>, vector<128x128xf32>
    %cst_8 = arith.constant dense<0.000000e+00> : vector<8x128xf32>
    %9 = tpu.matmul %7, %8, %cst_8 {dimension_numbers = #tpu.dot_dimension_numbers<[1], [0], [0], [1], [0, 0, 1, 1], [], []>} : vector<8x128xf32>, vector<128x128xf32>, vector<8x128xf32> -> vector<8x128xf32>
    %c0_9 = arith.constant 0 : index
    %c0_10 = arith.constant 0 : index
    %10 = vector.load %arg5[%c0_9, %c0_10] : memref<1x128xf32, #tpu.memory_space<vmem>>, vector<1x128xf32>
    %11 = vector.broadcast %10 : vector<1x128xf32> to vector<8x128xf32>
    %12 = arith.addf %9, %11 : vector<8x128xf32>
    %cst_11 = arith.constant 0.000000e+00 : f32
    %13 = vector.broadcast %cst_11 : f32 to vector<8x128xf32>
    %14 = arith.maximumf %12, %13 : vector<8x128xf32>
    %c0_12 = arith.constant 0 : index
    %c0_13 = arith.constant 0 : index
    %15 = vector.load %arg6[%c0_12, %c0_13] : memref<128x128xf32, #tpu.memory_space<vmem>>, vector<128x128xf32>
    %cst_14 = arith.constant dense<0.000000e+00> : vector<8x128xf32>
    %16 = tpu.matmul %14, %15, %cst_14 {dimension_numbers = #tpu.dot_dimension_numbers<[1], [0], [0], [1], [0, 0, 1, 1], [], []>} : vector<8x128xf32>, vector<128x128xf32>, vector<8x128xf32> -> vector<8x128xf32>
    %c0_15 = arith.constant 0 : index
    %c0_16 = arith.constant 0 : index
    %17 = vector.load %arg7[%c0_15, %c0_16] : memref<1x128xf32, #tpu.memory_space<vmem>>, vector<1x128xf32>
    %18 = vector.broadcast %17 : vector<1x128xf32> to vector<8x128xf32>
    %19 = arith.addf %16, %18 : vector<8x128xf32>
    %cst_17 = arith.constant 0.000000e+00 : f32
    %20 = vector.broadcast %cst_17 : f32 to vector<8x128xf32>
    %21 = arith.maximumf %19, %20 : vector<8x128xf32>
    %c0_18 = arith.constant 0 : index
    %c0_19 = arith.constant 0 : index
    %22 = vector.load %arg8[%c0_18, %c0_19] : memref<128x128xf32, #tpu.memory_space<vmem>>, vector<128x128xf32>
    %cst_20 = arith.constant dense<0.000000e+00> : vector<8x128xf32>
    %23 = tpu.matmul %21, %22, %cst_20 {dimension_numbers = #tpu.dot_dimension_numbers<[1], [0], [0], [1], [0, 0, 1, 1], [], []>} : vector<8x128xf32>, vector<128x128xf32>, vector<8x128xf32> -> vector<8x128xf32>
    %24 = vector.extract_strided_slice %23 {offsets = [0, 0], sizes = [8, 1], strides = [1, 1]} : vector<8x128xf32> to vector<8x1xf32>
    %c0_21 = arith.constant 0 : index
    %c0_22 = arith.constant 0 : index
    %25 = vector.load %arg9[%c0_21, %c0_22] : memref<1x128xf32, #tpu.memory_space<vmem>>, vector<1x128xf32>
    %26 = vector.extract_strided_slice %25 {offsets = [0, 0], sizes = [1, 1], strides = [1, 1]} : vector<1x128xf32> to vector<1x1xf32>
    %27 = vector.broadcast %26 : vector<1x1xf32> to vector<8x1xf32>
    %28 = arith.addf %24, %27 : vector<8x1xf32>
    %c0_23 = arith.constant 0 : index
    %c0_24 = arith.constant 0 : index
    %29 = vector.load %arg10[%c0_23, %c0_24] : memref<8x1xf32, #tpu.memory_space<vmem>>, vector<8x1xf32>
    tpu.vector_store %arg10[%c0_23, %c0_24], %28 {strides = array<i32>} : memref<8x1xf32, #tpu.memory_space<vmem>>, vector<8x1xf32>,
    return
  }
  func.func @transform_0(%arg0: i32) -> (i32, i32) {
    %c0_i32 = arith.constant 0 : i32
    %c0_i32_0 = arith.constant 0 : i32
    return %arg0, %c0_i32 : i32, i32
  }
  func.func @transform_1(%arg0: i32) -> (i32, i32) {
    %c0_i32 = arith.constant 0 : i32
    %c0_i32_0 = arith.constant 0 : i32
    %c0_i32_1 = arith.constant 0 : i32
    return %c0_i32, %c0_i32_0 : i32, i32
  }
  func.func @transform_2(%arg0: i32) -> (i32, i32) {
    %c0_i32 = arith.constant 0 : i32
    %c0_i32_0 = arith.constant 0 : i32
    %c0_i32_1 = arith.constant 0 : i32
    return %c0_i32, %c0_i32_0 : i32, i32
  }
  func.func @transform_3(%arg0: i32) -> (i32, i32) {
    %c0_i32 = arith.constant 0 : i32
    %c0_i32_0 = arith.constant 0 : i32
    %c0_i32_1 = arith.constant 0 : i32
    return %c0_i32, %c0_i32_0 : i32, i32
  }
  func.func @transform_4(%arg0: i32) -> (i32, i32) {
    %c0_i32 = arith.constant 0 : i32
    %c0_i32_0 = arith.constant 0 : i32
    %c0_i32_1 = arith.constant 0 : i32
    return %c0_i32, %c0_i32_0 : i32, i32
  }
  func.func @transform_5(%arg0: i32) -> (i32, i32) {
    %c0_i32 = arith.constant 0 : i32
    %c0_i32_0 = arith.constant 0 : i32
    %c0_i32_1 = arith.constant 0 : i32
    return %c0_i32, %c0_i32_0 : i32, i32
  }
  func.func @transform_6(%arg0: i32) -> (i32, i32) {
    %c0_i32 = arith.constant 0 : i32
    %c0_i32_0 = arith.constant 0 : i32
    %c0_i32_1 = arith.constant 0 : i32
    return %c0_i32, %c0_i32_0 : i32, i32
  }
  func.func @transform_7(%arg0: i32) -> (i32, i32) {
    %c0_i32 = arith.constant 0 : i32
    %c0_i32_0 = arith.constant 0 : i32
    %c0_i32_1 = arith.constant 0 : i32
    return %c0_i32, %c0_i32_0 : i32, i32
  }
  func.func @transform_8(%arg0: i32) -> (i32, i32) {
    %c0_i32 = arith.constant 0 : i32
    %c0_i32_0 = arith.constant 0 : i32
    %c0_i32_1 = arith.constant 0 : i32
    return %c0_i32, %c0_i32_0 : i32, i32
  }
  func.func @transform_9(%arg0: i32) -> (i32, i32) {
    %c0_i32 = arith.constant 0 : i32
    %c0_i32_0 = arith.constant 0 : i32
    return %arg0, %c0_i32 : i32, i32
  }
}

</mosaic_0001>

<llo_original>
// kernel: modelw1_forward.1
$region0: #{modelw1_forward.1}
  #allocation0 [shape = 'u32[]', space=smem, size = 0x4, offset = 0x4, fixed_abs, tag = 'smem constant byte address 0x4 - core index']
  #allocation1 [shape = 'u32[144,128]{1,0:T(1,128)}', space=vmem, size = 0x12000, scoped, tag = 'internal scratch']
  %s0 = inlined_call_operand.vmem [shape: f32[8,32], index: 0, kind: input, shape index: {}]
  %s1 = inlined_call_operand.vmem [shape: f32[32,128], index: 1, kind: input, shape index: {}]
  %s2 = inlined_call_operand.vmem [shape: f32[1,128], index: 2, kind: input, shape index: {}]
  %s3 = inlined_call_operand.vmem [shape: f32[128,128], index: 3, kind: input, shape index: {}]
  %s4 = inlined_call_operand.vmem [shape: f32[1,128], index: 4, kind: input, shape index: {}]
  %s5 = inlined_call_operand.vmem [shape: f32[128,128], index: 5, kind: input, shape index: {}]
  %s6 = inlined_call_operand.vmem [shape: f32[1,128], index: 6, kind: input, shape index: {}]
  %s7 = inlined_call_operand.vmem [shape: f32[128,128], index: 7, kind: input, shape index: {}]
  %s8 = inlined_call_operand.vmem [shape: f32[1,128], index: 8, kind: input, shape index: {}]
  %s9 = inlined_call_operand.vmem [shape: f32[8,1], index: 9, kind: output, shape index: {}]
  %s10 = sld [smem:[#allocation0]]
  $region46: #{modelw1_forward.1} parent=0
    _
  %s12 = ssub.s32 1, %s10
  %s13 = scalar_select 0, %s12, %s10
  // Predicated region
  $region2: #{modelw1_forward.1} parent=0 // pred_check
    _
  $region3: #{modelw1_forward.1} parent=0 // pred_check_branch
    %15 = sbr.rel (0) target = $region5
  $region4: #{modelw1_forward.1} parent=0 // pred_region
    _
  $region5: #{modelw1_forward.1} parent=0 // pred_fallthru
    _
  // Predicated region
  $region6: #{modelw1_forward.1} parent=0 // pred_check
    _
  $region7: #{modelw1_forward.1} parent=0 // pred_check_branch
    %17 = sbr.rel (0) target = $region9
  $region8: #{modelw1_forward.1} parent=0 // pred_region
    _
  $region9: #{modelw1_forward.1} parent=0 // pred_fallthru
    _
  // Predicated region
  $region10: #{modelw1_forward.1} parent=0 // pred_check
    _
  $region11: #{modelw1_forward.1} parent=0 // pred_check_branch
    %19 = sbr.rel (0) target = $region13
  $region12: #{modelw1_forward.1} parent=0 // pred_region
    _
  $region13: #{modelw1_forward.1} parent=0 // pred_fallthru
    _
  // Predicated region
  $region14: #{modelw1_forward.1} parent=0 // pred_check
    _
  $region15: #{modelw1_forward.1} parent=0 // pred_check_branch
    %21 = sbr.rel (0) target = $region17
  $region16: #{modelw1_forward.1} parent=0 // pred_region
    _
  $region17: #{modelw1_forward.1} parent=0 // pred_fallthru
    _
  // Predicated region
  $region18: #{modelw1_forward.1} parent=0 // pred_check
    _
  $region19: #{modelw1_forward.1} parent=0 // pred_check_branch
    %23 = sbr.rel (0) target = $region21
  $region20: #{modelw1_forward.1} parent=0 // pred_region
    _
  $region21: #{modelw1_forward.1} parent=0 // pred_fallthru
    _
  // Predicated region
  $region22: #{modelw1_forward.1} parent=0 // pred_check
    _
  $region23: #{modelw1_forward.1} parent=0 // pred_check_branch
    %25 = sbr.rel (0) target = $region25
  $region24: #{modelw1_forward.1} parent=0 // pred_region
    _
  $region25: #{modelw1_forward.1} parent=0 // pred_fallthru
    _
  // Predicated region
  $region26: #{modelw1_forward.1} parent=0 // pred_check
    _
  $region27: #{modelw1_forward.1} parent=0 // pred_check_branch
    %27 = sbr.rel (0) target = $region29
  $region28: #{modelw1_forward.1} parent=0 // pred_region
    _
  $region29: #{modelw1_forward.1} parent=0 // pred_fallthru
    _
  // Predicated region
  $region30: #{modelw1_forward.1} parent=0 // pred_check
    _
  $region31: #{modelw1_forward.1} parent=0 // pred_check_branch
    %29 = sbr.rel (0) target = $region33
  $region32: #{modelw1_forward.1} parent=0 // pred_region
    _
  $region33: #{modelw1_forward.1} parent=0 // pred_fallthru
    _
  // Predicated region
  $region34: #{modelw1_forward.1} parent=0 // pred_check
    _
  $region35: #{modelw1_forward.1} parent=0 // pred_check_branch
    %31 = sbr.rel (0) target = $region37
  $region36: #{modelw1_forward.1} parent=0 // pred_region
    _
  $region37: #{modelw1_forward.1} parent=0 // pred_fallthru
    _
  %v32 = vld [vmem:[%s0] sm:$0xff]
  %v33 = vld [vmem:[%s1] sm:$0xff]
  %v34 = vld [vmem:[%s1 + $0x8] sm:$0xff]
  %v35 = vld [vmem:[%s1 + $0x10] sm:$0xff]
  %v36 = vld [vmem:[%s1 + $0x18] sm:$0xff]
  %v37 = vld [vmem:[%s2] sm:$0x1]
  %v39 = vlaneseq
  %v40 = vshrl.u32 %v39, 7
  %v41 = vsub.s32 0, %v40
  %v42 = vrot.slane %v37, %v41
  %vm44 = vcmask 261120
  %v46 = vsel %vm44, %v32, 0
  %48 = vmatprep.subr.mxu0 0.0
  %49 = vmatpush1.msra.mxu0 0.0
  %50 = vmatprep.subr.mxu0 0.0
  %51 = vmatpush1.msra.mxu0 0.0
  %52 = vmatprep.subr.mxu0 0.0
  %53 = vmatpush1.msra.mxu0 0.0
  %54 = vmatprep.subr.mxu0 0.0
  %55 = vmatpush1.msra.mxu0 0.0
  %56 = vmatprep.subr.mxu0 0.0
  %57 = vmatpush1.msra.mxu0 0.0
  %58 = vmatprep.subr.mxu0 0.0
  %59 = vmatpush1.msra.mxu0 0.0
  %60 = vmatprep.subr.mxu0 0.0
  %61 = vmatpush1.msra.mxu0 0.0
  %62 = vmatprep.subr.mxu0 0.0
  %63 = vmatpush1.msra.mxu0 0.0
  %64 = vmatprep.subr.mxu0 0.0
  %65 = vmatpush1.msra.mxu0 0.0
  %66 = vmatprep.subr.mxu0 0.0
  %67 = vmatpush1.msra.mxu0 0.0
  %68 = vmatprep.subr.mxu0 0.0
  %69 = vmatpush1.msra.mxu0 0.0
  %70 = vmatprep.subr.mxu0 0.0
  %71 = vmatpush1.msra.mxu0 0.0
  %72 = vmatprep.subr.mxu0 0.0
  %73 = vmatpush1.msra.mxu0 %v36
  %74 = vmatprep.subr.mxu0 0.0
  %75 = vmatpush1.msra.mxu0 %v35
  %76 = vmatprep.subr.mxu0 0.0
  %77 = vmatpush1.msra.mxu0 %v34
  %78 = vmatprep.subr.mxu0 0.0
  %79 = vmatpush1.msra.mxu0 %v33
  %80 = vmatprep.subr.mxu0 0.0
  %81 = vmatpush2.msra.mxu0 0.0
  %82 = vmatprep.subr.mxu0 0.0
  %83 = vmatpush2.msra.mxu0 0.0
  %84 = vmatprep.subr.mxu0 0.0
  %85 = vmatpush2.msra.mxu0 0.0
  %86 = vmatprep.subr.mxu0 0.0
  %87 = vmatpush2.msra.mxu0 0.0
  %88 = vmatprep.subr.mxu0 0.0
  %89 = vmatpush2.msra.mxu0 0.0
  %90 = vmatprep.subr.mxu0 0.0
  %91 = vmatpush2.msra.mxu0 0.0
  %92 = vmatprep.subr.mxu0 0.0
  %93 = vmatpush2.msra.mxu0 0.0
  %94 = vmatprep.subr.mxu0 0.0
  %95 = vmatpush2.msra.mxu0 0.0
  %96 = vmatprep.subr.mxu0 0.0
  %97 = vmatpush2.msra.mxu0 0.0
  %98 = vmatprep.subr.mxu0 0.0
  %99 = vmatpush2.msra.mxu0 0.0
  %100 = vmatprep.subr.mxu0 0.0
  %101 = vmatpush2.msra.mxu0 0.0
  %102 = vmatprep.subr.mxu0 0.0
  %103 = vmatpush2.msra.mxu0 0.0
  %104 = vmatprep.subr.mxu0 0.0
  %105 = vmatpush2.msra.mxu0 0.0
  %106 = vmatprep.subr.mxu0 0.0
  %107 = vmatpush2.msra.mxu0 0.0
  %108 = vmatprep.subr.mxu0 0.0
  %109 = vmatpush2.msra.mxu0 0.0
  %110 = vmatprep.subr.mxu0 0.0
  %111 = vmatpush2.msra.mxu0 0.0
  %112 = vmatprep.mubr.f32.mxu0 0.0
  %113 = vmatmul.mubr.f32.gmra.mxu0 %v46
  %v114 = vpop.f32.mrf.mxu0
  %v115 = vadd.f32 %v42, %v114
  %v116 = vpop.f32.mrf.mxu0
  %117 = vdwg.mxu0
  %v118 = vmax.f32 %v115, 0.0
  %v119 = vld [vmem:[%s3] sm:$0xff]
  %v120 = vld [vmem:[%s3 + $0x8] sm:$0xff]
  %v121 = vld [vmem:[%s3 + $0x10] sm:$0xff]
  %v122 = vld [vmem:[%s3 + $0x18] sm:$0xff]
  %v123 = vld [vmem:[%s3 + $0x20] sm:$0xff]
  %v124 = vld [vmem:[%s3 + $0x28] sm:$0xff]
  %v125 = vld [vmem:[%s3 + $0x30] sm:$0xff]
  %v126 = vld [vmem:[%s3 + $0x38] sm:$0xff]
  %v127 = vld [vmem:[%s3 + $0x40] sm:$0xff]
  %v128 = vld [vmem:[%s3 + $0x48] sm:$0xff]
  %v129 = vld [vmem:[%s3 + $0x50] sm:$0xff]
  %v130 = vld [vmem:[%s3 + $0x58] sm:$0xff]
  %v131 = vld [vmem:[%s3 + $0x60] sm:$0xff]
  %v132 = vld [vmem:[%s3 + $0x68] sm:$0xff]
  %v133 = vld [vmem:[%s3 + $0x70] sm:$0xff]
  %v134 = vld [vmem:[%s3 + $0x78] sm:$0xff]
  %v135 = vld [vmem:[%s4] sm:$0x1]
  %v137 = vlaneseq
  %v138 = vshrl.u32 %v137, 7
  %v139 = vsub.s32 0, %v138
  %v140 = vrot.slane %v135, %v139
  %142 = vmatprep.subr.mxu0 0.0
  %143 = vmatpush1.msra.mxu0 %v134
  %144 = vmatprep.subr.mxu0 0.0
  %145 = vmatpush1.msra.mxu0 %v133
  %146 = vmatprep.subr.mxu0 0.0
  %147 = vmatpush1.msra.mxu0 %v132
  %148 = vmatprep.subr.mxu0 0.0
  %149 = vmatpush1.msra.mxu0 %v131
  %150 = vmatprep.subr.mxu0 0.0
  %151 = vmatpush1.msra.mxu0 %v130
  %152 = vmatprep.subr.mxu0 0.0
  %153 = vmatpush1.msra.mxu0 %v129
  %154 = vmatprep.subr.mxu0 0.0
  %155 = vmatpush1.msra.mxu0 %v128
  %156 = vmatprep.subr.mxu0 0.0
  %157 = vmatpush1.msra.mxu0 %v127
  %158 = vmatprep.subr.mxu0 0.0
  %159 = vmatpush1.msra.mxu0 %v126
  %160 = vmatprep.subr.mxu0 0.0
  %161 = vmatpush1.msra.mxu0 %v125
  %162 = vmatprep.subr.mxu0 0.0
  %163 = vmatpush1.msra.mxu0 %v124
  %164 = vmatprep.subr.mxu0 0.0
  %165 = vmatpush1.msra.mxu0 %v123
  %166 = vmatprep.subr.mxu0 0.0
  %167 = vmatpush1.msra.mxu0 %v122
  %168 = vmatprep.subr.mxu0 0.0
  %169 = vmatpush1.msra.mxu0 %v121
  %170 = vmatprep.subr.mxu0 0.0
  %171 = vmatpush1.msra.mxu0 %v120
  %172 = vmatprep.subr.mxu0 0.0
  %173 = vmatpush1.msra.mxu0 %v119
  %174 = vmatprep.subr.mxu0 0.0
  %175 = vmatpush2.msra.mxu0 0.0
  %176 = vmatprep.subr.mxu0 0.0
  %177 = vmatpush2.msra.mxu0 0.0
  %178 = vmatprep.subr.mxu0 0.0
  %179 = vmatpush2.msra.mxu0 0.0
  %180 = vmatprep.subr.mxu0 0.0
  %181 = vmatpush2.msra.mxu0 0.0
  %182 = vmatprep.subr.mxu0 0.0
  %183 = vmatpush2.msra.mxu0 0.0
  %184 = vmatprep.subr.mxu0 0.0
  %185 = vmatpush2.msra.mxu0 0.0
  %186 = vmatprep.subr.mxu0 0.0
  %187 = vmatpush2.msra.mxu0 0.0
  %188 = vmatprep.subr.mxu0 0.0
  %189 = vmatpush2.msra.mxu0 0.0
  %190 = vmatprep.subr.mxu0 0.0
  %191 = vmatpush2.msra.mxu0 0.0
  %192 = vmatprep.subr.mxu0 0.0
  %193 = vmatpush2.msra.mxu0 0.0
  %194 = vmatprep.subr.mxu0 0.0
  %195 = vmatpush2.msra.mxu0 0.0
  %196 = vmatprep.subr.mxu0 0.0
  %197 = vmatpush2.msra.mxu0 0.0
  %198 = vmatprep.subr.mxu0 0.0
  %199 = vmatpush2.msra.mxu0 0.0
  %200 = vmatprep.subr.mxu0 0.0
  %201 = vmatpush2.msra.mxu0 0.0
  %202 = vmatprep.subr.mxu0 0.0
  %203 = vmatpush2.msra.mxu0 0.0
  %204 = vmatprep.subr.mxu0 0.0
  %205 = vmatpush2.msra.mxu0 0.0
  %206 = vmatprep.mubr.f32.mxu0 0.0
  %207 = vmatmul.mubr.f32.gmra.mxu0 %v118
  %v208 = vpop.f32.mrf.mxu0
  %v209 = vadd.f32 %v140, %v208
  %v210 = vpop.f32.mrf.mxu0
  %211 = vdwg.mxu0
  %v212 = vmax.f32 %v209, 0.0
  %v213 = vld [vmem:[%s5] sm:$0xff]
  %v214 = vld [vmem:[%s5 + $0x8] sm:$0xff]
  %v215 = vld [vmem:[%s5 + $0x10] sm:$0xff]
  %v216 = vld [vmem:[%s5 + $0x18] sm:$0xff]
  %v217 = vld [vmem:[%s5 + $0x20] sm:$0xff]
  %v218 = vld [vmem:[%s5 + $0x28] sm:$0xff]
  %v219 = vld [vmem:[%s5 + $0x30] sm:$0xff]
  %v220 = vld [vmem:[%s5 + $0x38] sm:$0xff]
  %v221 = vld [vmem:[%s5 + $0x40] sm:$0xff]
  %v222 = vld [vmem:[%s5 + $0x48] sm:$0xff]
  %v223 = vld [vmem:[%s5 + $0x50] sm:$0xff]
  %v224 = vld [vmem:[%s5 + $0x58] sm:$0xff]
  %v225 = vld [vmem:[%s5 + $0x60] sm:$0xff]
  %v226 = vld [vmem:[%s5 + $0x68] sm:$0xff]
  %v227 = vld [vmem:[%s5 + $0x70] sm:$0xff]
  %v228 = vld [vmem:[%s5 + $0x78] sm:$0xff]
  %v229 = vld [vmem:[%s6] sm:$0x1]
  %v231 = vlaneseq
  %v232 = vshrl.u32 %v231, 7
  %v233 = vsub.s32 0, %v232
  %v234 = vrot.slane %v229, %v233
  %236 = vmatprep.subr.mxu0 0.0
  %237 = vmatpush1.msra.mxu0 %v228
  %238 = vmatprep.subr.mxu0 0.0
  %239 = vmatpush1.msra.mxu0 %v227
  %240 = vmatprep.subr.mxu0 0.0
  %241 = vmatpush1.msra.mxu0 %v226
  %242 = vmatprep.subr.mxu0 0.0
  %243 = vmatpush1.msra.mxu0 %v225
  %244 = vmatprep.subr.mxu0 0.0
  %245 = vmatpush1.msra.mxu0 %v224
  %246 = vmatprep.subr.mxu0 0.0
  %247 = vmatpush1.msra.mxu0 %v223
  %248 = vmatprep.subr.mxu0 0.0
  %249 = vmatpush1.msra.mxu0 %v222
  %250 = vmatprep.subr.mxu0 0.0
  %251 = vmatpush1.msra.mxu0 %v221
  %252 = vmatprep.subr.mxu0 0.0
  %253 = vmatpush1.msra.mxu0 %v220
  %254 = vmatprep.subr.mxu0 0.0
  %255 = vmatpush1.msra.mxu0 %v219
  %256 = vmatprep.subr.mxu0 0.0
  %257 = vmatpush1.msra.mxu0 %v218
  %258 = vmatprep.subr.mxu0 0.0
  %259 = vmatpush1.msra.mxu0 %v217
  %260 = vmatprep.subr.mxu0 0.0
  %261 = vmatpush1.msra.mxu0 %v216
  %262 = vmatprep.subr.mxu0 0.0
  %263 = vmatpush1.msra.mxu0 %v215
  %264 = vmatprep.subr.mxu0 0.0
  %265 = vmatpush1.msra.mxu0 %v214
  %266 = vmatprep.subr.mxu0 0.0
  %267 = vmatpush1.msra.mxu0 %v213
  %268 = vmatprep.subr.mxu0 0.0
  %269 = vmatpush2.msra.mxu0 0.0
  %270 = vmatprep.subr.mxu0 0.0
  %271 = vmatpush2.msra.mxu0 0.0
  %272 = vmatprep.subr.mxu0 0.0
  %273 = vmatpush2.msra.mxu0 0.0
  %274 = vmatprep.subr.mxu0 0.0
  %275 = vmatpush2.msra.mxu0 0.0
  %276 = vmatprep.subr.mxu0 0.0
  %277 = vmatpush2.msra.mxu0 0.0
  %278 = vmatprep.subr.mxu0 0.0
  %279 = vmatpush2.msra.mxu0 0.0
  %280 = vmatprep.subr.mxu0 0.0
  %281 = vmatpush2.msra.mxu0 0.0
  %282 = vmatprep.subr.mxu0 0.0
  %283 = vmatpush2.msra.mxu0 0.0
  %284 = vmatprep.subr.mxu0 0.0
  %285 = vmatpush2.msra.mxu0 0.0
  %286 = vmatprep.subr.mxu0 0.0
  %287 = vmatpush2.msra.mxu0 0.0
  %288 = vmatprep.subr.mxu0 0.0
  %289 = vmatpush2.msra.mxu0 0.0
  %290 = vmatprep.subr.mxu0 0.0
  %291 = vmatpush2.msra.mxu0 0.0
  %292 = vmatprep.subr.mxu0 0.0
  %293 = vmatpush2.msra.mxu0 0.0
  %294 = vmatprep.subr.mxu0 0.0
  %295 = vmatpush2.msra.mxu0 0.0
  %296 = vmatprep.subr.mxu0 0.0
  %297 = vmatpush2.msra.mxu0 0.0
  %298 = vmatprep.subr.mxu0 0.0
  %299 = vmatpush2.msra.mxu0 0.0
  %300 = vmatprep.mubr.f32.mxu0 0.0
  %301 = vmatmul.mubr.f32.gmra.mxu0 %v212
  %v302 = vpop.f32.mrf.mxu0
  %v303 = vadd.f32 %v234, %v302
  %v304 = vpop.f32.mrf.mxu0
  %305 = vdwg.mxu0
  %v306 = vmax.f32 %v303, 0.0
  %v307 = vld [vmem:[%s7] sm:$0xff]
  %v308 = vld [vmem:[%s7 + $0x8] sm:$0xff]
  %v309 = vld [vmem:[%s7 + $0x10] sm:$0xff]
  %v310 = vld [vmem:[%s7 + $0x18] sm:$0xff]
  %v311 = vld [vmem:[%s7 + $0x20] sm:$0xff]
  %v312 = vld [vmem:[%s7 + $0x28] sm:$0xff]
  %v313 = vld [vmem:[%s7 + $0x30] sm:$0xff]
  %v314 = vld [vmem:[%s7 + $0x38] sm:$0xff]
  %v315 = vld [vmem:[%s7 + $0x40] sm:$0xff]
  %v316 = vld [vmem:[%s7 + $0x48] sm:$0xff]
  %v317 = vld [vmem:[%s7 + $0x50] sm:$0xff]
  %v318 = vld [vmem:[%s7 + $0x58] sm:$0xff]
  %v319 = vld [vmem:[%s7 + $0x60] sm:$0xff]
  %v320 = vld [vmem:[%s7 + $0x68] sm:$0xff]
  %v321 = vld [vmem:[%s7 + $0x70] sm:$0xff]
  %v322 = vld [vmem:[%s7 + $0x78] sm:$0xff]
  %323 = vmatprep.subr.mxu0 0.0
  %324 = vmatpush1.msra.mxu0 %v322
  %325 = vmatprep.subr.mxu0 0.0
  %326 = vmatpush1.msra.mxu0 %v321
  %327 = vmatprep.subr.mxu0 0.0
  %328 = vmatpush1.msra.mxu0 %v320
  %329 = vmatprep.subr.mxu0 0.0
  %330 = vmatpush1.msra.mxu0 %v319
  %331 = vmatprep.subr.mxu0 0.0
  %332 = vmatpush1.msra.mxu0 %v318
  %333 = vmatprep.subr.mxu0 0.0
  %334 = vmatpush1.msra.mxu0 %v317
  %335 = vmatprep.subr.mxu0 0.0
  %336 = vmatpush1.msra.mxu0 %v316
  %337 = vmatprep.subr.mxu0 0.0
  %338 = vmatpush1.msra.mxu0 %v315
  %339 = vmatprep.subr.mxu0 0.0
  %340 = vmatpush1.msra.mxu0 %v314
  %341 = vmatprep.subr.mxu0 0.0
  %342 = vmatpush1.msra.mxu0 %v313
  %343 = vmatprep.subr.mxu0 0.0
  %344 = vmatpush1.msra.mxu0 %v312
  %345 = vmatprep.subr.mxu0 0.0
  %346 = vmatpush1.msra.mxu0 %v311
  %347 = vmatprep.subr.mxu0 0.0
  %348 = vmatpush1.msra.mxu0 %v310
  %349 = vmatprep.subr.mxu0 0.0
  %350 = vmatpush1.msra.mxu0 %v309
  %351 = vmatprep.subr.mxu0 0.0
  %352 = vmatpush1.msra.mxu0 %v308
  %353 = vmatprep.subr.mxu0 0.0
  %354 = vmatpush1.msra.mxu0 %v307
  %355 = vmatprep.subr.mxu0 0.0
  %356 = vmatpush2.msra.mxu0 0.0
  %357 = vmatprep.subr.mxu0 0.0
  %358 = vmatpush2.msra.mxu0 0.0
  %359 = vmatprep.subr.mxu0 0.0
  %360 = vmatpush2.msra.mxu0 0.0
  %361 = vmatprep.subr.mxu0 0.0
  %362 = vmatpush2.msra.mxu0 0.0
  %363 = vmatprep.subr.mxu0 0.0
  %364 = vmatpush2.msra.mxu0 0.0
  %365 = vmatprep.subr.mxu0 0.0
  %366 = vmatpush2.msra.mxu0 0.0
  %367 = vmatprep.subr.mxu0 0.0
  %368 = vmatpush2.msra.mxu0 0.0
  %369 = vmatprep.subr.mxu0 0.0
  %370 = vmatpush2.msra.mxu0 0.0
  %371 = vmatprep.subr.mxu0 0.0
  %372 = vmatpush2.msra.mxu0 0.0
  %373 = vmatprep.subr.mxu0 0.0
  %374 = vmatpush2.msra.mxu0 0.0
  %375 = vmatprep.subr.mxu0 0.0
  %376 = vmatpush2.msra.mxu0 0.0
  %377 = vmatprep.subr.mxu0 0.0
  %378 = vmatpush2.msra.mxu0 0.0
  %379 = vmatprep.subr.mxu0 0.0
  %380 = vmatpush2.msra.mxu0 0.0
  %381 = vmatprep.subr.mxu0 0.0
  %382 = vmatpush2.msra.mxu0 0.0
  %383 = vmatprep.subr.mxu0 0.0
  %384 = vmatpush2.msra.mxu0 0.0
  %385 = vmatprep.subr.mxu0 0.0
  %386 = vmatpush2.msra.mxu0 0.0
  %387 = vmatprep.mubr.f32.mxu0 0.0
  %388 = vmatmul.mubr.f32.gmra.mxu0 %v306
  %v389 = vpop.f32.mrf.mxu0
  %v390 = vadd.f32 0.0, %v389
  %v391 = vpop.f32.mrf.mxu0
  %392 = vdwg.mxu0
  %v393 = vld [vmem:[%s8] sm:$0x1]
  %v395 = vlaneseq
  %v396 = vshrl.u32 %v395, 7
  %v397 = vsub.s32 0, %v396
  %v398 = vrot.slane %v393, %v397
  %v400 = vadd.f32 %v390, %v398
  %vm401 = vcmask 7168
  %402 = vst.msk [vmem:[%s9] sm:$0xff] %vm401, %v400
  // Predicated region
  $region38: #{modelw1_forward.1} parent=0 // pred_check
    _
  $region39: #{modelw1_forward.1} parent=0 // pred_check_branch
    %404 = sbr.rel (0) target = $region41
  $region40: #{modelw1_forward.1} parent=0 // pred_region
    _
  $region41: #{modelw1_forward.1} parent=0 // pred_fallthru
    _
  // Predicated region
  $region42: #{modelw1_forward.1} parent=0 // pred_check
    _
  $region43: #{modelw1_forward.1} parent=0 // pred_check_branch
    %406 = sbr.rel (0) target = $region45
  $region44: #{modelw1_forward.1} parent=0 // pred_region
    _
  $region45: #{modelw1_forward.1} parent=0 // pred_fallthru
    _

</llo_original>
